<compile_context>
chip_gen: v7x
topology: tpu7x:2x2x1
jax: 0.10.0
libtpu: 0.0.40
codegen_flags: <defaults>
</compile_context>

<pallas_src>
import jax
import jax.numpy as jnp
from jax.experimental import pallas as pl
from jax.experimental.pallas import tpu as pltpu


def _round_up(x, m):
    return (x + m - 1) // m * m


def _axial_pos_kernel(w_ref, e_ref, out_ref):
    # w_ref  : (BD, K)   channel-major stacked axial weights [w0 | w1] (f32)
    # e_ref  : (K,  BT)  one-hot expansion matrix (f32)
    # out_ref: (BD, BT)  lane-dense channel-major positional block:
    #          out[d, p] = w0[d, p // wax] + w1[d, p % wax]
    w = w_ref[...]
    e = e_ref[...]
    # bf16-exact head + tiny residual: keeps full f32 accuracy for the one-hot
    # contraction even if the backend multiplies f32 MXU operands in bf16.
    w_hi = w.astype(jnp.bfloat16).astype(jnp.float32)
    w_lo = w - w_hi
    acc = jnp.dot(w_hi, e, preferred_element_type=jnp.float32)
    acc = acc + jnp.dot(w_lo, e, preferred_element_type=jnp.float32)
    # Single whole-block cast + dense, unmasked, 128-aligned store.
    out_ref[...] = acc.astype(out_ref.dtype)


def _plan_blocks(d, k, t_pad, out_itemsize):
    """Channel/lane padding and block sizes.

    * bt: multiple of 128 dividing t_pad, <= 4096 lanes, one-hot block capped.
    * bd: multiple of 8, output block capped (~4 MiB so double-buffering fits
      every generation's scoped VMEM, incl. v7x's 64 MiB physical VMEM).
    * >= 2 total grid steps whenever the shapes allow it (feed both v7x cores,
      enable pipeline overlap).
    Returns (d_pad, bd, t_pad, bt).
    """
    target = 4 << 20
    # Lane (spatial) block: largest multiple of 128 that divides t_pad, capped.
    units = t_pad // 128
    unit_cap = max(1, min(4096, target // max(1, k * 4)) // 128)
    bt_units = 1
    for cand in range(min(units, unit_cap), 0, -1):
        if units % cand == 0:
            bt_units = cand
            break
    bt = 128 * bt_units
    # Channel block: multiple of 8, capped bytes.
    d8 = _round_up(d, 8)
    max_bd = max(8, (target // max(1, bt * out_itemsize)) // 8 * 8)
    bd = min(d8, max_bd)
    if d8 > 8 and bd >= d8 and bt >= t_pad:
        bd = max(8, (d8 // 16) * 8)        # force >= 2 grid steps
    d_pad = _round_up(d, bd)
    return d_pad, bd, t_pad, bt


def axial_pos_emb_chw(w0_cm, w1_cm, h, w, out_dtype):
    """Positional-embedding slab, channel-major, shape (dim, h, w).

    w0_cm: (dim, H_ax)  channel-major H-axis weights.
    w1_cm: (dim, W_ax)  channel-major W-axis weights.
    """
    d = int(w0_cm.shape[0])
    wax = int(w1_cm.shape[1])
    t = h * w
    rows = -(-t // wax)                      # only the axial rows actually used
    t_pad = _round_up(rows * wax, 128)       # 128-lane-aligned output slab
    k = _round_up(rows + wax, 128)           # stacked+padded contraction dim
    out_itemsize = jnp.dtype(out_dtype).itemsize
    d_pad, bd, t_total, bt = _plan_blocks(d, k, t_pad, out_itemsize)

    # Stacked channel-major parameter W = [w0_used | w1], zero-padded to
    # (d_pad, k).  Padded rows/columns contribute exactly 0 through E.
    wcat = jnp.zeros((d_pad, k), jnp.float32)
    wcat = wcat.at[:d, :rows].set(w0_cm[:, :rows].astype(jnp.float32))
    wcat = wcat.at[:d, rows:rows + wax].set(w1_cm.astype(jnp.float32))

    # One-hot expansion matrix:
    #   E[i, p]        = (p // wax == i)        for i < rows      (H half)
    #   E[rows + j, p] = (p %  wax == j)        for 0 <= j < wax  (W half)
    # so (W @ E)[d, p] = w0[d, p // wax] + w1[d, p % wax].
    kk = jnp.arange(k, dtype=jnp.int32)[:, None]
    pp = jnp.arange(t_total, dtype=jnp.int32)[None, :]
    e = jnp.where(kk < rows, (pp // wax) == kk,
                  (pp % wax) == (kk - rows)).astype(jnp.float32)

    # Explicit VMEM budget: double-buffered W/E/out blocks + f32 intermediates.
    est = (2 * bd * k * 4 + 2 * k * bt * 4
           + 2 * bd * bt * out_itemsize + 3 * bd * bt * 4)
    vmem_limit = int(min(32 << 20, max(8 << 20, 2 * est)))

    slab = pl.pallas_call(
        _axial_pos_kernel,
        out_shape=jax.ShapeDtypeStruct((d_pad, t_total), out_dtype),
        grid=(d_pad // bd, t_total // bt),
        in_specs=[
            pl.BlockSpec((bd, k), lambda ci, ti: (ci, 0)),   # W channel block
            pl.BlockSpec((k, bt), lambda ci, ti: (0, ti)),   # E lane block
        ],
        out_specs=pl.BlockSpec((bd, bt), lambda ci, ti: (ci, ti)),
        compiler_params=pltpu.CompilerParams(
            dimension_semantics=("parallel", "parallel"),
            vmem_limit_bytes=vmem_limit,
        ),
    )(wcat, e)

    # Truncation + reshape are contiguous in the channel-major layout and run
    # once per cached (h, w, dtype).
    return slab[:d, :t].reshape(d, h, w)


class AxialPositionalEmbeddingImage:
    """JAX/Pallas port of the PyTorch module (summed axial dims)."""

    def __init__(self, dim, axial_shape, key, axial_dims=None):
        assert len(axial_shape) == 2, "Axial shape must have 2 dimensions for images"
        # TODO(synk): concatenated axial_dims mode (axial_dims is not None) is
        # not implemented; only the summed mode of the reference is supported.
        assert axial_dims is None, "only summed axial dims are supported"
        self.dim = dim
        self.axial_shape = tuple(axial_shape)
        H, W = self.axial_shape
        self.max_seq_len = H * W
        k0, k1 = jax.random.split(key)
        # PyTorch params: weights_0 (1, H, 1, dim), weights_1 (1, 1, W, dim),
        # init ~ N(0, 1).  Stored channel-major -- (dim, H) / (dim, W) -- so the
        # kernel emits a lane-dense channel-major slab with no transposes.
        self.w0 = jax.random.normal(k0, (dim, H), dtype=jnp.float32)
        self.w1 = jax.random.normal(k1, (dim, W), dtype=jnp.float32)
        self._pos_cache = {}   # (h, w, dtype name) -> (dim, h, w) slab

    def positional_embedding(self, h, w, dtype=jnp.float32):
        """Cached (dim, h, w) positional slab (computed by the Pallas kernel once)."""
        ck = (int(h), int(w), jnp.dtype(dtype).name)
        slab = self._pos_cache.get(ck)
        if slab is None:
            slab = axial_pos_emb_chw(self.w0, self.w1, int(h), int(w), dtype)
            self._pos_cache[ck] = slab   # eager usage: concrete array cached
        return slab

    def __call__(self, img):
        b, c, h, w = img.shape
        assert c == self.dim, "channel dim must equal embedding dim"
        t = h * w
        assert t <= self.max_seq_len, (
            f"Sequence length ({t}) must be <= max sequence length ({self.max_seq_len})"
        )
        chw = self.positional_embedding(h, w, img.dtype)
        # Drop-in output semantics (b, c, h, w), matching the PyTorch forward.
        # TODO(synk): consumers that immediately compute `img + pos` should add
        # the cached (c, h, w) slab directly (XLA fuses the broadcast into the
        # add under jit) instead of materializing b copies here.
        return jnp.broadcast_to(chw[None], (b, c, h, w))


def _reference(img, w0_cm, w1_cm, axial_shape):
    """Pure-JAX reference mirroring the PyTorch forward exactly."""
    b, c, h, w = img.shape
    H, W = axial_shape
    t = h * w
    full = w0_cm.T[:, None, :] + w1_cm.T[None, :, :]          # (H, W, D) in f32
    flat = full.reshape(H * W, c)[:t].astype(img.dtype)       # (t, D)
    out = jnp.broadcast_to(flat.reshape(h, w, c)[None], (b, h, w, c))
    return jnp.transpose(out, (0, 3, 1, 2))                   # NCHW


if __name__ == "__main__":
    key = jax.random.PRNGKey(0)
    k_img, k_img2, k_mod = jax.random.split(key, 3)

    b, c = 2, 32
    axial_shape = (16, 16)
    module = AxialPositionalEmbeddingImage(dim=c, axial_shape=axial_shape, key=k_mod)

    # Tolerance covers the worst case where the f32 MXU path uses bf16 passes:
    # the bf16-head term is exact, the residual term error is <~1e-4 absolute.
    TOL = dict(atol=5e-4, rtol=5e-4)

    # Case 1: full axial grid (h*w == max_seq_len).
    img = jax.random.normal(k_img, (b, c, 16, 16), dtype=jnp.float32)
    out = jax.block_until_ready(module(img))
    ref = _reference(img, module.w0, module.w1, axial_shape)
    assert out.shape == img.shape, out.shape
    assert out.dtype == img.dtype, out.dtype
    assert jnp.allclose(out, ref, **TOL), "mismatch vs reference (full grid)"

    # Case 2: truncation path (t = 100 < max_seq_len, not a multiple of W_ax).
    img2 = jax.random.normal(k_img2, (b, c, 10, 10), dtype=jnp.float32)
    out2 = jax.block_until_ready(module(img2))
    ref2 = _reference(img2, module.w0, module.w1, axial_shape)
    assert out2.shape == img2.shape, out2.shape
    assert jnp.allclose(out2, ref2, **TOL), "mismatch vs reference (truncated)"

    # Case 3: bf16 image dtype (exercises the in-kernel cast + dtype-keyed cache).
    img3 = img.astype(jnp.bfloat16)
    out3 = jax.block_until_ready(module(img3))
    ref3 = _reference(img3, module.w0, module.w1, axial_shape)
    assert out3.dtype == jnp.bfloat16, out3.dtype
    assert jnp.allclose(out3.astype(jnp.float32), ref3.astype(jnp.float32),
                        atol=5e-2, rtol=5e-2), "mismatch vs reference (bf16)"

    # Cached path: second call reuses the precomputed slab (no kernel relaunch).
    out_again = jax.block_until_ready(module(img))
    assert jnp.array_equal(out_again, out), "cached slab mismatch"

    print("KERNEL_OK")
</pallas_src>

<mosaic_0001>
module attributes {stable_mosaic.version = 11 : i64} {
  func.func @_axial_pos_kernel(%arg0: i32, %arg1: i32, %arg2: memref<16x128xf32, #tpu.memory_space<vmem>>, %arg3: memref<128x256xf32, #tpu.memory_space<vmem>>, %arg4: memref<16x256xf32, #tpu.memory_space<vmem>>) attributes {dimension_semantics = [#tpu.dimension_semantics<parallel>, #tpu.dimension_semantics<parallel>], iteration_bounds = array<i64: 2, 1>, scalar_prefetch = 0 : i64, scratch_operands = 0 : i64, tpu.core_type = #tpu.core_type<tc>, window_params = [{transform_indices = @transform_0, window_bounds = array<i64: 16, 128>}, {transform_indices = @transform_1, window_bounds = array<i64: 128, 256>}, {transform_indices = @transform_2, window_bounds = array<i64: 16, 256>}]} {
    %c0 = arith.constant 0 : index
    %c0_0 = arith.constant 0 : index
    %0 = vector.load %arg2[%c0, %c0_0] : memref<16x128xf32, #tpu.memory_space<vmem>>, vector<16x128xf32>
    %c0_1 = arith.constant 0 : index
    %c0_2 = arith.constant 0 : index
    %1 = vector.load %arg3[%c0_1, %c0_2] : memref<128x256xf32, #tpu.memory_space<vmem>>, vector<128x256xf32>
    %2 = arith.truncf %0 : vector<16x128xf32> to vector<16x128xbf16>
    %3 = arith.extf %2 : vector<16x128xbf16> to vector<16x128xf32>
    %4 = arith.subf %0, %3 : vector<16x128xf32>
    %cst = arith.constant dense<0.000000e+00> : vector<16x256xf32>
    %5 = tpu.matmul %3, %1, %cst {dimension_numbers = #tpu.dot_dimension_numbers<[1], [0], [0], [1], [0, 0, 1, 1], [], []>} : vector<16x128xf32>, vector<128x256xf32>, vector<16x256xf32> -> vector<16x256xf32>
    %cst_3 = arith.constant dense<0.000000e+00> : vector<16x256xf32>
    %6 = tpu.matmul %4, %1, %cst_3 {dimension_numbers = #tpu.dot_dimension_numbers<[1], [0], [0], [1], [0, 0, 1, 1], [], []>} : vector<16x128xf32>, vector<128x256xf32>, vector<16x256xf32> -> vector<16x256xf32>
    %7 = arith.addf %5, %6 : vector<16x256xf32>
    %c0_4 = arith.constant 0 : index
    %c0_5 = arith.constant 0 : index
    %8 = vector.load %arg4[%c0_4, %c0_5] : memref<16x256xf32, #tpu.memory_space<vmem>>, vector<16x256xf32>
    tpu.vector_store %arg4[%c0_4, %c0_5], %7 {strides = array<i32>} : memref<16x256xf32, #tpu.memory_space<vmem>>, vector<16x256xf32>,
    return
  }
  func.func @transform_0(%arg0: i32, %arg1: i32) -> (i32, i32) {
    %c0_i32 = arith.constant 0 : i32
    %c0_i32_0 = arith.constant 0 : i32
    return %arg0, %c0_i32 : i32, i32
  }
  func.func @transform_1(%arg0: i32, %arg1: i32) -> (i32, i32) {
    %c0_i32 = arith.constant 0 : i32
    %c0_i32_0 = arith.constant 0 : i32
    return %c0_i32, %arg1 : i32, i32
  }
  func.func @transform_2(%arg0: i32, %arg1: i32) -> (i32, i32) {
    %c0_i32 = arith.constant 0 : i32
    return %arg0, %arg1 : i32, i32
  }
}

</mosaic_0001>

<llo_original>
// kernel: tpu_custom_call.1
$region0: #{tpu_custom_call.1}
  #allocation0 [shape = 'u32[]', space=smem, size = 0x4, offset = 0x4, fixed_abs, tag = 'smem constant byte address 0x4 - core index']
  #allocation1 [shape = 'u32[144,128]{1,0:T(1,128)}', space=vmem, size = 0x12000, scoped, tag = 'internal scratch']
  %s0 = inlined_call_operand.hbm [shape: f32[32,128], index: 0, kind: input, shape index: {}]
  %s1 = inlined_call_operand.hbm [shape: f32[128,256], index: 1, kind: input, shape index: {}]
  %s2 = inlined_call_operand.hbm [shape: f32[32,256], index: 2, kind: output, shape index: {}]
  %s3 = sld [smem:[#allocation0]]
  $region49: #{tpu_custom_call.1} parent=0
    _
  %s5 = ssub.s32 1, %s3
  %s6 = scalar_select 0, %s5, %s3
  $region1: #{tpu_custom_call.1} parent=0
    #allocation2 [shape = 'u8[16384]{0}', space=vmem, size = 0x4000, scoped, tag = 'input window, operand 0']
    #allocation3 [shape = 's32[2]{0}', space=sflag, size = 0x8, scoped, tag = 'scoped memory for tpu_custom_call.1']
    #allocation4 [shape = 's32[2]{0}', space=sflag, size = 0x8, scoped, tag = 'scoped memory for tpu_custom_call.1']
    #allocation5 [shape = 'u8[131072]{0}', space=vmem, size = 0x20000, scoped, tag = 'input window, operand 1, single buffered']
    #allocation6 [shape = 's32[1]{0}', space=sflag, size = 0x4, scoped, tag = 'scoped memory for tpu_custom_call.1']
    #allocation7 [shape = 'u8[32768]{0}', space=vmem, size = 0x8000, scoped, tag = 'output window, operand 0']
    %7 = vsyncpa [#allocation3], 0
    %s8 = scalar_lea.sflag [#allocation3], 1
    %9 = vsyncpa %s8, 0
    %10 = vsyncpa [#allocation6], 0
    %11 = vsyncpa [#allocation4], 0
    %s12 = scalar_lea.sflag [#allocation4], 1
    %13 = vsyncpa %s12, 0
    loop: start=0, step=1, limit=4
    $region2: #{tpu_custom_call.1} parent=1 // loop_pre_header
      _
    $region3: #{tpu_custom_call.1} parent=1 // loop_header
      %s15 = sphi 0, %s19
      %p16 = scmp.ge.s32.totalorder %s15, 4
      %s22 = sphi 0, %s34
      %s23 = sphi 0, %s30
      %s24 = sphi 0, %s22
      %s25 = sphi 0, %s23
      %s26 = sphi 0, %s24
      %s27 = sphi 0, %s25
      %s37 = sphi 0, %s39
      %s40 = sphi 0, %s37
      %s41 = sphi 0, %s40
      %s57 = sphi 0, %s41
      %s63 = sphi 0, %s65
      %s66 = sphi 0, %s63
      %s67 = sphi 0, %s66
      %s83 = sphi 0, %s67
      %s91 = sphi 0, %s93
      %s94 = sphi 0, %s91
      %s95 = sphi 0, %s94
      %s111 = sphi 0, %s95
    $region4: #{tpu_custom_call.1} parent=1 // loop_header_branch
      %18 = sbr.rel (%p16) target = $region8
    $region5: #{tpu_custom_call.1} parent=1 // loop_body
      %s20 = ssub.s32 %s15, 1
      %s21 = ssub.s32 %s15, 2
      %s28 = sadd.s32 1, %s23
      %p29 = scmp.ge.s32.totalorder %s28, 1
      %s30 = scalar_select %p29, 0, %s28
      %s31 = sadd.s32 1, %s22
      %s32 = scalar_select %p29, %s31, %s22
      %p33 = scmp.ge.s32.totalorder %s32, 2
      %s34 = scalar_select %p33, 0, %s32
      %s35 = ssub.s32 %s22, %s34
      %p36 = scmp.eq.s32.totalorder %s35, 0
      %s38 = sadd.s32 %s37, 1
      %s39 = scalar_select %p36, %s37, %s38
      %p42 = pneg %p36
      %p43 = scmp.eq.s32.totalorder %s15, 1
      %p44 = por %p42, %p43
      %p45 = scmp.ne.s32.totalorder %s37, %s40
      %p46 = scmp.eq.s32.totalorder %s15, 0
      %p47 = por %p45, %p46
      %p48 = scmp.ne.s32.totalorder %s37, %s40
      %p49 = scmp.eq.s32.totalorder %s20, 1
      %p50 = por %p48, %p49
      %p51 = scmp.ne.s32.totalorder %s40, %s41
      %p52 = scmp.eq.s32.totalorder %s20, 0
      %p53 = por %p51, %p52
      %p54 = scmp.ne.s32.totalorder %s40, %s41
      %p55 = scmp.eq.s32.totalorder %s21, 1
      %p56 = por %p54, %p55
      %p58 = scmp.ne.s32.totalorder %s41, %s57
      %p59 = scmp.eq.s32.totalorder %s21, 0
      %p60 = por %p58, %p59
      %s61 = ssub.s32 %s23, %s30
      %p62 = scmp.eq.s32.totalorder %s61, 0
      %s64 = sadd.s32 %s63, 1
      %s65 = scalar_select %p62, %s63, %s64
      %p68 = pneg %p62
      %p69 = scmp.eq.s32.totalorder %s15, 1
      %p70 = por %p68, %p69
      %p71 = scmp.ne.s32.totalorder %s63, %s66
      %p72 = scmp.eq.s32.totalorder %s15, 0
      %p73 = por %p71, %p72
      %p74 = scmp.ne.s32.totalorder %s63, %s66
      %p75 = scmp.eq.s32.totalorder %s20, 1
      %p76 = por %p74, %p75
      %p77 = scmp.ne.s32.totalorder %s66, %s67
      %p78 = scmp.eq.s32.totalorder %s20, 0
      %p79 = por %p77, %p78
      %p80 = scmp.ne.s32.totalorder %s66, %s67
      %p81 = scmp.eq.s32.totalorder %s21, 1
      %p82 = por %p80, %p81
      %p84 = scmp.ne.s32.totalorder %s67, %s83
      %p85 = scmp.eq.s32.totalorder %s21, 0
      %p86 = por %p84, %p85
      %s87 = ssub.s32 %s22, %s34
      %s88 = ssub.s32 %s23, %s30
      %s89 = sor.u32 %s87, %s88
      %p90 = scmp.eq.s32.totalorder %s89, 0
      %s92 = sadd.s32 %s91, 1
      %s93 = scalar_select %p90, %s91, %s92
      %p96 = pneg %p90
      %p97 = scmp.eq.s32.totalorder %s15, 1
      %p98 = por %p96, %p97
      %p99 = scmp.ne.s32.totalorder %s91, %s94
      %p100 = scmp.eq.s32.totalorder %s15, 0
      %p101 = por %p99, %p100
      %p102 = scmp.ne.s32.totalorder %s91, %s94
      %p103 = scmp.eq.s32.totalorder %s20, 1
      %p104 = por %p102, %p103
      %p105 = scmp.ne.s32.totalorder %s94, %s95
      %p106 = scmp.eq.s32.totalorder %s20, 0
      %p107 = por %p105, %p106
      %p108 = scmp.ne.s32.totalorder %s94, %s95
      %p109 = scmp.eq.s32.totalorder %s21, 1
      %p110 = por %p108, %p109
      %p112 = scmp.ne.s32.totalorder %s95, %s111
      %p113 = scmp.eq.s32.totalorder %s21, 0
      %p114 = por %p112, %p113
      %p115 = scmp.le.s32.totalorder 1, %s15
      %p116 = scmp.lt.s32.totalorder %s15, 3
      %p117 = pnand %p115, %p116
      %p118 = pneg %p117
      // Predicated region
      $region9: #{tpu_custom_call.1} parent=5 // pred_check
        _
      $region10: #{tpu_custom_call.1} parent=5 // pred_check_branch
        %120 = sbr.rel (%p117) target = $region12
      $region11: #{tpu_custom_call.1} parent=5 // pred_region
        %s121 = ssub.s32 %s15, 1
        // Predicated region
        $region13: #{tpu_custom_call.1} parent=11 // pred_check
          %p122 = pneg %p79
        $region14: #{tpu_custom_call.1} parent=11 // pred_check_branch
          %124 = sbr.rel (%p122) target = $region16
        $region15: #{tpu_custom_call.1} parent=11 // pred_region
          %s125 = smul.u32 2, %s25
          %s127 = ssub.s32 4096, 4096
          %128 = vsyncadd [#allocation6], %s127
          %s129 = smul.addr %s125, 128
          %s130 = scalar_lea.hbm %s1, %s129
          %s131 = sshll.u32 [#allocation5], 4
          %s132 = int_to_ptr.vmem [resolvable:$true] %s131
          %137 = dma.hbm_to_vmem [thread:$0]  %s130, 4096, %s132, [#allocation6], 256, 256, 16
        $region16: #{tpu_custom_call.1} parent=11 // pred_fallthru
          _
      $region12: #{tpu_custom_call.1} parent=5 // pred_fallthru
        _
      %p138 = scmp.lt.s32.totalorder %s15, 2
      // Predicated region
      $region17: #{tpu_custom_call.1} parent=5 // pred_check
        %p139 = pneg %p138
      $region18: #{tpu_custom_call.1} parent=5 // pred_check_branch
        %141 = sbr.rel (%p139) target = $region20
      $region19: #{tpu_custom_call.1} parent=5 // pred_region
        // Predicated region
        $region21: #{tpu_custom_call.1} parent=19 // pred_check
          %p142 = pneg %p47
        $region22: #{tpu_custom_call.1} parent=19 // pred_check_branch
          %144 = sbr.rel (%p142) target = $region24
        $region23: #{tpu_custom_call.1} parent=19 // pred_region
          %s145 = sand.u32 %s37, 1
          %s146 = scalar_lea.sflag [#allocation3], %s145
          %s147 = sand.u32 %s37, 1
          %s148 = smul.addr %s147, 16
          %s149 = scalar_lea.vmem [#allocation2], %s148
          %s150 = smul.u32 2, %s22
          %s152 = ssub.s32 256, 256
          %153 = vsyncadd %s146, %s152
          %s154 = smul.addr %s150, 128
          %s155 = scalar_lea.hbm %s0, %s154
          %s156 = sshll.u32 %s149, 4
          %s157 = int_to_ptr.vmem [resolvable:$true] %s156
          %162 = dma.hbm_to_vmem [thread:$0]  %s155, 256, %s157, %s146, 128, 128, 8
        $region24: #{tpu_custom_call.1} parent=19 // pred_fallthru
          _
      $region20: #{tpu_custom_call.1} parent=5 // pred_fallthru
        _
      %p163 = scmp.le.s32.totalorder 1, %s15
      %p164 = scmp.lt.s32.totalorder %s15, 3
      %p165 = pnand %p163, %p164
      %p166 = pneg %p165
      // Predicated region
      $region25: #{tpu_custom_call.1} parent=5 // pred_check
        _
      $region26: #{tpu_custom_call.1} parent=5 // pred_check_branch
        %168 = sbr.rel (%p165) target = $region28
      $region27: #{tpu_custom_call.1} parent=5 // pred_region
        %s169 = ssub.s32 %s15, 1
        %s170 = sand.u32 %s40, 1
        %s171 = scalar_lea.sflag [#allocation3], %s170
        %s172 = sand.u32 %s40, 1
        %s173 = smul.addr %s172, 16
        %s174 = scalar_lea.vmem [#allocation2], %s173
        // Predicated region
        $region29: #{tpu_custom_call.1} parent=27 // pred_check
          %p175 = pneg %p53
        $region30: #{tpu_custom_call.1} parent=27 // pred_check_branch
          %177 = sbr.rel (%p175) target = $region32
        $region31: #{tpu_custom_call.1} parent=27 // pred_region
          %178 = dma.done %s171, 256
        $region32: #{tpu_custom_call.1} parent=27 // pred_fallthru
          _
        // Predicated region
        $region33: #{tpu_custom_call.1} parent=27 // pred_check
          %p179 = pneg %p79
        $region34: #{tpu_custom_call.1} parent=27 // pred_check_branch
          %181 = sbr.rel (%p179) target = $region36
        $region35: #{tpu_custom_call.1} parent=27 // pred_region
          %182 = dma.done [#allocation6], 4096
        $region36: #{tpu_custom_call.1} parent=27 // pred_fallthru
          _
        %s183 = sand.u32 %s40, 1
        %s184 = scalar_lea.sflag [#allocation3], %s183
        %s185 = sand.u32 %s40, 1
        %s186 = smul.addr %s185, 16
        %s187 = scalar_lea.vmem [#allocation2], %s186
        %p188 = pneg %p53
        %p189 = pneg %p50
        %p190 = pneg %p79
        %p191 = pneg %p76
        %p192 = pneg %p107
        %p193 = pneg %p104
        %s194 = sand.u32 %s94, 1
        %s195 = scalar_lea.sflag [#allocation4], %s194
        %s196 = sand.u32 %s94, 1
        %s197 = smul.addr %s196, 32
        %s198 = scalar_lea.vmem [#allocation7], %s197
        %s199 = smul.u32 2, %s24
        %s200 = smul.u32 2, %s25
        %s201 = smul.u32 2, %s24
        %s202 = smul.u32 2, %s25
        %v203 = vld [vmem:[%s174] sm:$0xff]
        %v204 = vld [vmem:[%s174 + $0x8] sm:$0xff]
        %v205 = vld [vmem:[#allocation5] sm:$0xff]
        %v206 = vld [vmem:[#allocation5 + $0x8] sm:$0xff]
        %v207 = vld [vmem:[#allocation5 + $0x10] sm:$0xff]
        %v208 = vld [vmem:[#allocation5 + $0x18] sm:$0xff]
        %v209 = vld [vmem:[#allocation5 + $0x20] sm:$0xff]
        %v210 = vld [vmem:[#allocation5 + $0x28] sm:$0xff]
        %v211 = vld [vmem:[#allocation5 + $0x30] sm:$0xff]
        %v212 = vld [vmem:[#allocation5 + $0x38] sm:$0xff]
        %v213 = vld [vmem:[#allocation5 + $0x40] sm:$0xff]
        %v214 = vld [vmem:[#allocation5 + $0x48] sm:$0xff]
        %v215 = vld [vmem:[#allocation5 + $0x50] sm:$0xff]
        %v216 = vld [vmem:[#allocation5 + $0x58] sm:$0xff]
        %v217 = vld [vmem:[#allocation5 + $0x60] sm:$0xff]
        %v218 = vld [vmem:[#allocation5 + $0x68] sm:$0xff]
        %v219 = vld [vmem:[#allocation5 + $0x70] sm:$0xff]
        %v220 = vld [vmem:[#allocation5 + $0x78] sm:$0xff]
        %v221 = vld [vmem:[#allocation5 + $0x80] sm:$0xff]
        %v222 = vld [vmem:[#allocation5 + $0x88] sm:$0xff]
        %v223 = vld [vmem:[#allocation5 + $0x90] sm:$0xff]
        %v224 = vld [vmem:[#allocation5 + $0x98] sm:$0xff]
        %v225 = vld [vmem:[#allocation5 + $0xa0] sm:$0xff]
        %v226 = vld [vmem:[#allocation5 + $0xa8] sm:$0xff]
        %v227 = vld [vmem:[#allocation5 + $0xb0] sm:$0xff]
        %v228 = vld [vmem:[#allocation5 + $0xb8] sm:$0xff]
        %v229 = vld [vmem:[#allocation5 + $0xc0] sm:$0xff]
        %v230 = vld [vmem:[#allocation5 + $0xc8] sm:$0xff]
        %v231 = vld [vmem:[#allocation5 + $0xd0] sm:$0xff]
        %v232 = vld [vmem:[#allocation5 + $0xd8] sm:$0xff]
        %v233 = vld [vmem:[#allocation5 + $0xe0] sm:$0xff]
        %v234 = vld [vmem:[#allocation5 + $0xe8] sm:$0xff]
        %v235 = vld [vmem:[#allocation5 + $0xf0] sm:$0xff]
        %v236 = vld [vmem:[#allocation5 + $0xf8] sm:$0xff]
        %v237 = vpack.c.bf16 %v204, %v203
        %v238 = vunpack.c.l.bf16 %v237
        %v239 = vunpack.c.h.bf16 %v237
        %v240 = vsub.f32 %v203, %v238
        %v241 = vsub.f32 %v204, %v239
        %242 = vmatprep.subr.mxu0 %v206
        %243 = vmatpush1.msra.mxu0 %v205
        %244 = vmatprep.subr.mxu0 %v208
        %245 = vmatpush1.msra.mxu0 %v207
        %246 = vmatprep.subr.mxu0 %v210
        %247 = vmatpush1.msra.mxu0 %v209
        %248 = vmatprep.subr.mxu0 %v212
        %249 = vmatpush1.msra.mxu0 %v211
        %250 = vmatprep.subr.mxu0 %v214
        %251 = vmatpush1.msra.mxu0 %v213
        %252 = vmatprep.subr.mxu0 %v216
        %253 = vmatpush1.msra.mxu0 %v215
        %254 = vmatprep.subr.mxu0 %v218
        %255 = vmatpush1.msra.mxu0 %v217
        %256 = vmatprep.subr.mxu0 %v220
        %257 = vmatpush1.msra.mxu0 %v219
        %258 = vmatprep.subr.mxu0 %v222
        %259 = vmatpush1.msra.mxu0 %v221
        %260 = vmatprep.subr.mxu0 %v224
        %261 = vmatpush1.msra.mxu0 %v223
        %262 = vmatprep.subr.mxu0 %v226
        %263 = vmatpush1.msra.mxu0 %v225
        %264 = vmatprep.subr.mxu0 %v228
        %265 = vmatpush1.msra.mxu0 %v227
        %266 = vmatprep.subr.mxu0 %v230
        %267 = vmatpush1.msra.mxu0 %v229
        %268 = vmatprep.subr.mxu0 %v232
        %269 = vmatpush1.msra.mxu0 %v231
        %270 = vmatprep.subr.mxu0 %v234
        %271 = vmatpush1.msra.mxu0 %v233
        %272 = vmatprep.subr.mxu0 %v236
        %273 = vmatpush1.msra.mxu0 %v235
        %274 = vmatprep.subr.mxu0 0.0
        %275 = vmatpush1.msra.mxu0 0.0
        %276 = vmatprep.subr.mxu0 0.0
        %277 = vmatpush1.msra.mxu0 0.0
        %278 = vmatprep.subr.mxu0 0.0
        %279 = vmatpush1.msra.mxu0 0.0
        %280 = vmatprep.subr.mxu0 0.0
        %281 = vmatpush1.msra.mxu0 0.0
        %282 = vmatprep.subr.mxu0 0.0
        %283 = vmatpush1.msra.mxu0 0.0
        %284 = vmatprep.subr.mxu0 0.0
        %285 = vmatpush1.msra.mxu0 0.0
        %286 = vmatprep.subr.mxu0 0.0
        %287 = vmatpush1.msra.mxu0 0.0
        %288 = vmatprep.subr.mxu0 0.0
        %289 = vmatpush1.msra.mxu0 0.0
        %290 = vmatprep.subr.mxu0 0.0
        %291 = vmatpush1.msra.mxu0 0.0
        %292 = vmatprep.subr.mxu0 0.0
        %293 = vmatpush1.msra.mxu0 0.0
        %294 = vmatprep.subr.mxu0 0.0
        %295 = vmatpush1.msra.mxu0 0.0
        %296 = vmatprep.subr.mxu0 0.0
        %297 = vmatpush1.msra.mxu0 0.0
        %298 = vmatprep.subr.mxu0 0.0
        %299 = vmatpush1.msra.mxu0 0.0
        %300 = vmatprep.subr.mxu0 0.0
        %301 = vmatpush1.msra.mxu0 0.0
        %302 = vmatprep.subr.mxu0 0.0
        %303 = vmatpush1.msra.mxu0 0.0
        %304 = vmatprep.subr.mxu0 0.0
        %305 = vmatpush1.msra.mxu0 0.0
        %306 = vmatprep.mubr.f32.mxu0 0.0
        %307 = vmatmul.mubr.f32.gmra.mrb[0].mxu0 %v240
        %v308 = vpop.f32.mrb[0].mxu0
        %v309 = vadd.f32 0.0, %v308
        %v310 = vpop.f32.mrb[0].mxu0
        %v311 = vadd.f32 0.0, %v310
        %312 = vmatprep.mubr.f32.mxu0 0.0
        %313 = vmatmul.mubr.f32.gmra.mrb[0].mxu0 %v241
        %v314 = vpop.f32.mrb[0].mxu0
        %v315 = vadd.f32 0.0, %v314
        %v316 = vpop.f32.mrb[0].mxu0
        %v317 = vadd.f32 0.0, %v316
        %318 = vdwg.mxu0
        %319 = vmatprep.subr.mxu0 %v206
        %320 = vmatpush1.msra.mxu0 %v205
        %321 = vmatprep.subr.mxu0 %v208
        %322 = vmatpush1.msra.mxu0 %v207
        %323 = vmatprep.subr.mxu0 %v210
        %324 = vmatpush1.msra.mxu0 %v209
        %325 = vmatprep.subr.mxu0 %v212
        %326 = vmatpush1.msra.mxu0 %v211
        %327 = vmatprep.subr.mxu0 %v214
        %328 = vmatpush1.msra.mxu0 %v213
        %329 = vmatprep.subr.mxu0 %v216
        %330 = vmatpush1.msra.mxu0 %v215
        %331 = vmatprep.subr.mxu0 %v218
        %332 = vmatpush1.msra.mxu0 %v217
        %333 = vmatprep.subr.mxu0 %v220
        %334 = vmatpush1.msra.mxu0 %v219
        %335 = vmatprep.subr.mxu0 %v222
        %336 = vmatpush1.msra.mxu0 %v221
        %337 = vmatprep.subr.mxu0 %v224
        %338 = vmatpush1.msra.mxu0 %v223
        %339 = vmatprep.subr.mxu0 %v226
        %340 = vmatpush1.msra.mxu0 %v225
        %341 = vmatprep.subr.mxu0 %v228
        %342 = vmatpush1.msra.mxu0 %v227
        %343 = vmatprep.subr.mxu0 %v230
        %344 = vmatpush1.msra.mxu0 %v229
        %345 = vmatprep.subr.mxu0 %v232
        %346 = vmatpush1.msra.mxu0 %v231
        %347 = vmatprep.subr.mxu0 %v234
        %348 = vmatpush1.msra.mxu0 %v233
        %349 = vmatprep.subr.mxu0 %v236
        %350 = vmatpush1.msra.mxu0 %v235
        %351 = vmatprep.subr.mxu0 0.0
        %352 = vmatpush1.msra.mxu0 0.0
        %353 = vmatprep.subr.mxu0 0.0
        %354 = vmatpush1.msra.mxu0 0.0
        %355 = vmatprep.subr.mxu0 0.0
        %356 = vmatpush1.msra.mxu0 0.0
        %357 = vmatprep.subr.mxu0 0.0
        %358 = vmatpush1.msra.mxu0 0.0
        %359 = vmatprep.subr.mxu0 0.0
        %360 = vmatpush1.msra.mxu0 0.0
        %361 = vmatprep.subr.mxu0 0.0
        %362 = vmatpush1.msra.mxu0 0.0
        %363 = vmatprep.subr.mxu0 0.0
        %364 = vmatpush1.msra.mxu0 0.0
        %365 = vmatprep.subr.mxu0 0.0
        %366 = vmatpush1.msra.mxu0 0.0
        %367 = vmatprep.subr.mxu0 0.0
        %368 = vmatpush1.msra.mxu0 0.0
        %369 = vmatprep.subr.mxu0 0.0
        %370 = vmatpush1.msra.mxu0 0.0
        %371 = vmatprep.subr.mxu0 0.0
        %372 = vmatpush1.msra.mxu0 0.0
        %373 = vmatprep.subr.mxu0 0.0
        %374 = vmatpush1.msra.mxu0 0.0
        %375 = vmatprep.subr.mxu0 0.0
        %376 = vmatpush1.msra.mxu0 0.0
        %377 = vmatprep.subr.mxu0 0.0
        %378 = vmatpush1.msra.mxu0 0.0
        %379 = vmatprep.subr.mxu0 0.0
        %380 = vmatpush1.msra.mxu0 0.0
        %381 = vmatprep.subr.mxu0 0.0
        %382 = vmatpush1.msra.mxu0 0.0
        %383 = vmatprep.mubr.f32.mxu0 0.0
        %384 = vmatmul.mubr.f32.gmra.mrb[0].mxu0 %v238
        %v385 = vpop.f32.mrb[0].mxu0
        %v386 = vadd.f32 %v309, %v385
        %v387 = vpop.f32.mrb[0].mxu0
        %v388 = vadd.f32 %v311, %v387
        %389 = vmatprep.mubr.f32.mxu0 0.0
        %390 = vmatmul.mubr.f32.gmra.mrb[0].mxu0 %v239
        %v391 = vpop.f32.mrb[0].mxu0
        %v392 = vadd.f32 %v315, %v391
        %v393 = vpop.f32.mrb[0].mxu0
        %v394 = vadd.f32 %v317, %v393
        %395 = vdwg.mxu0
        %396 = vst [vmem:[%s198] sm:$0xff] %v386
        %397 = vst [vmem:[%s198 + $0x8] sm:$0xff] %v388
        %398 = vst [vmem:[%s198 + $0x10] sm:$0xff] %v392
        %399 = vst [vmem:[%s198 + $0x18] sm:$0xff] %v394
        %s400 = sand.u32 %s94, 1
        %s401 = scalar_lea.sflag [#allocation4], %s400
        %s402 = sand.u32 %s94, 1
        %s403 = smul.addr %s402, 32
        %s404 = scalar_lea.vmem [#allocation7], %s403
        // Predicated region
        $region37: #{tpu_custom_call.1} parent=27 // pred_check
          %p405 = pneg %p104
        $region38: #{tpu_custom_call.1} parent=27 // pred_check_branch
          %407 = sbr.rel (%p405) target = $region40
        $region39: #{tpu_custom_call.1} parent=27 // pred_region
          %s408 = smul.u32 2, %s24
          %s409 = smul.u32 2, %s25
          %s411 = ssub.s32 512, 512
          %412 = vsyncadd %s401, %s411
          %s413 = smul.addr %s408, 2
          %s414 = sadd.s32 %s409, %s413
          %s415 = smul.addr %s414, 128
          %s416 = scalar_lea.hbm %s2, %s415
          %s417 = sshll.u32 %s404, 4
          %s418 = int_to_ptr.vmem [resolvable:$true] %s417
          %423 = dma.vmem_to_hbm [thread:$0]  %s418, 512, %s416, %s401, 256, 256, 16
        $region40: #{tpu_custom_call.1} parent=27 // pred_fallthru
          _
      $region28: #{tpu_custom_call.1} parent=5 // pred_fallthru
        _
      %p424 = scmp.le.s32.totalorder 2, %s15
      // Predicated region
      $region41: #{tpu_custom_call.1} parent=5 // pred_check
        %p425 = pneg %p424
      $region42: #{tpu_custom_call.1} parent=5 // pred_check_branch
        %427 = sbr.rel (%p425) target = $region44
      $region43: #{tpu_custom_call.1} parent=5 // pred_region
        %s428 = ssub.s32 %s15, 2
        // Predicated region
        $region45: #{tpu_custom_call.1} parent=43 // pred_check
          %p429 = pneg %p110
        $region46: #{tpu_custom_call.1} parent=43 // pred_check_branch
          %431 = sbr.rel (%p429) target = $region48
        $region47: #{tpu_custom_call.1} parent=43 // pred_region
          %s432 = sand.u32 %s95, 1
          %s433 = scalar_lea.sflag [#allocation4], %s432
          %s434 = sand.u32 %s95, 1
          %s435 = smul.addr %s434, 32
          %s436 = scalar_lea.vmem [#allocation7], %s435
          %437 = dma.done %s433, 512
        $region48: #{tpu_custom_call.1} parent=43 // pred_fallthru
          _
      $region44: #{tpu_custom_call.1} parent=5 // pred_fallthru
        _
    $region6: #{tpu_custom_call.1} parent=1 // loop_footer
      %s19 = sadd.s32 1, %s15
    $region7: #{tpu_custom_call.1} parent=1 // loop_footer_branch
      %14 = sbr.rel target = $region3
    $region8: #{tpu_custom_call.1} parent=1 // loop_exit
      _
    %438 = vsyncpa [#allocation3], 1
    %s439 = scalar_lea.sflag [#allocation3], 1
    %440 = vsyncpa %s439, 1
    %441 = vsyncpa [#allocation6], 1
    %442 = vsyncpa [#allocation4], 1
    %s443 = scalar_lea.sflag [#allocation4], 1
    %444 = vsyncpa %s443, 1

</llo_original>
